<compile_context>
chip_gen: v7x
topology: tpu7x:2x2x1
jax: 0.10.0
libtpu: 0.0.40
codegen_flags: <defaults>
</compile_context>

<pallas_src>
import warnings

import jax
import jax.numpy as jnp
import numpy as np
from jax.experimental import pallas as pl
from jax.experimental.pallas import tpu as pltpu

# Donation is consumed by the aliased pallas_call; keep output clean if XLA
# ever declines the alias (functionally identical either way).
warnings.filterwarnings("ignore", message="Some donated buffers were not usable")


# ----------------------------- Pallas kernel -------------------------------

def _identity_kernel(x_ref, o_ref):
    # LambdaLayer.forward: o = x  (full-tile copy; the DMA in/out is the work)
    o_ref[...] = x_ref[...]


# ------------------------------- helpers ------------------------------------

def _round_up(v, m):
    return (v + m - 1) // m * m


def _device_kind():
    try:
        return jax.devices()[0].device_kind.lower()
    except Exception:
        return ""


def _default_block_rows():
    kind = _device_kind()
    if "v7" in kind:
        # 8192 rows * 128 lanes * 4 B = 4 MiB f32 tile; double-buffered
        # in + out ~= 16 MiB, well under v7x's 64 MiB VMEM.  Amortizes the
        # ~0.35 us/grid-step overhead against 3.2 TB/s HBM.
        return 8192
    # v5e / v6e: 1 MiB f32 tiles already sit at ~85-86% of HBM roofline.
    return 2048


def _dim_semantics(grid_size):
    # Feedback: only CORE_PARALLEL changes codegen on v7x (2 TCs/chip); gate
    # by generation and only when there is more than one block to split.
    if grid_size >= 2 and "v7" in _device_kind():
        return (pltpu.CORE_PARALLEL,)
    return ("parallel",)


# ------------------------------- wrapper ------------------------------------

def lambda_layer(x, *, max_block_rows=None, lanes=128):
    """LambdaLayer.forward(x) == x, as a tiled, aliased Pallas copy kernel."""
    orig_shape = x.shape
    n = x.size
    if n == 0:
        return x

    if max_block_rows is None:
        max_block_rows = _default_block_rows()

    # Dtype-aware sublane packing: 8 for 4-byte, 16 for 2-byte, 32 for 1-byte.
    itemsize = jnp.dtype(x.dtype).itemsize
    sublane = max(8, 32 // max(itemsize, 1))

    rows = pl.cdiv(n, lanes)
    pad = rows * lanes - n

    flat = x.reshape(-1)
    if pad:
        # Only when n is not lane-aligned (pads at most lanes-1 elements).
        # No block-multiple padding: the ragged last block is masked by Pallas.
        flat = jnp.concatenate([flat, jnp.zeros((pad,), flat.dtype)])
    slab = flat.reshape(rows, lanes)

    max_rows_aligned = _round_up(max_block_rows, sublane)
    if rows <= max_rows_aligned:
        block_rows = rows  # single full-extent block: always legal, zero waste
    else:
        block_rows = max_rows_aligned  # (sublane,128)-aligned; last block ragged

    grid_size = pl.cdiv(rows, block_rows)

    out = pl.pallas_call(
        _identity_kernel,
        out_shape=jax.ShapeDtypeStruct((rows, lanes), slab.dtype),
        grid=(grid_size,),
        in_specs=[pl.BlockSpec((block_rows, lanes), lambda i: (i, 0))],
        out_specs=pl.BlockSpec((block_rows, lanes), lambda i: (i, 0)),
        # Identity: write back into the input's HBM buffer (no output alloc).
        input_output_aliases={0: 0},
        compiler_params=pltpu.CompilerParams(
            dimension_semantics=_dim_semantics(grid_size),
            vmem_limit_bytes=32 * 1024 * 1024,
        ),
    )(slab)

    if pad:
        out = out.reshape(-1)[:n]
    return out.reshape(orig_shape)


# ----------------------------------- main -----------------------------------

if __name__ == "__main__":
    key = jax.random.PRNGKey(0)
    x = jax.random.normal(key, (2, 4, 16, 16), jnp.float32)

    # Host-side reference copy: the device buffer of `x` is donated into the
    # jit so the aliased pallas_call can operate in place (no second HBM buf).
    x_host = np.asarray(x)

    fwd = jax.jit(lambda a: lambda_layer(a), donate_argnums=0)
    y = jax.block_until_ready(fwd(x))

    assert y.shape == x_host.shape, (y.shape, x_host.shape)
    assert y.dtype == x_host.dtype, (y.dtype, x_host.dtype)
    assert np.array_equal(np.asarray(y), x_host), "LambdaLayer must be the identity"
    print("KERNEL_OK")
</pallas_src>

<mosaic_0001>
module attributes {stable_mosaic.version = 11 : i64} {
  func.func @_identity_kernel(%arg0: i32, %arg1: memref<16x128xf32, #tpu.memory_space<vmem>>, %arg2: memref<16x128xf32, #tpu.memory_space<vmem>>) attributes {dimension_semantics = [#tpu.dimension_semantics<parallel>], iteration_bounds = array<i64: 1>, scalar_prefetch = 0 : i64, scratch_operands = 0 : i64, tpu.core_type = #tpu.core_type<tc>, window_params = [{transform_indices = @transform_0, window_bounds = array<i64: 16, 128>}, {transform_indices = @transform_1, window_bounds = array<i64: 16, 128>}]} {
    %c0 = arith.constant 0 : index
    %c0_0 = arith.constant 0 : index
    %0 = vector.load %arg1[%c0, %c0_0] : memref<16x128xf32, #tpu.memory_space<vmem>>, vector<16x128xf32>
    %c0_1 = arith.constant 0 : index
    %c0_2 = arith.constant 0 : index
    %1 = vector.load %arg2[%c0_1, %c0_2] : memref<16x128xf32, #tpu.memory_space<vmem>>, vector<16x128xf32>
    tpu.vector_store %arg2[%c0_1, %c0_2], %0 {strides = array<i32>} : memref<16x128xf32, #tpu.memory_space<vmem>>, vector<16x128xf32>,
    return
  }
  func.func @transform_0(%arg0: i32) -> (i32, i32) {
    %c0_i32 = arith.constant 0 : i32
    %c0_i32_0 = arith.constant 0 : i32
    return %arg0, %c0_i32 : i32, i32
  }
  func.func @transform_1(%arg0: i32) -> (i32, i32) {
    %c0_i32 = arith.constant 0 : i32
    %c0_i32_0 = arith.constant 0 : i32
    return %arg0, %c0_i32 : i32, i32
  }
}

</mosaic_0001>

<llo_original>
// kernel: _lambda_.1
$region0: #{_lambda_.1}
  #allocation0 [shape = 'u32[]', space=smem, size = 0x4, offset = 0x4, fixed_abs, tag = 'smem constant byte address 0x4 - core index']
  #allocation1 [shape = 'u32[144,128]{1,0:T(1,128)}', space=vmem, size = 0x12000, scoped, tag = 'internal scratch']
  %s0 = inlined_call_operand.vmem [shape: f32[16,128], index: 0, kind: input, shape index: {}, may-alias: {0,1}]
  %s1 = inlined_call_operand.vmem [shape: f32[16,128], index: 1, kind: output, shape index: {}, may-alias: {0,1}]
  %s2 = sld [smem:[#allocation0]]
  $region14: #{_lambda_.1} parent=0
    _
  %s4 = ssub.s32 1, %s2
  %s5 = scalar_select 0, %s4, %s2
  // Predicated region
  $region2: #{_lambda_.1} parent=0 // pred_check
    _
  $region3: #{_lambda_.1} parent=0 // pred_check_branch
    %7 = sbr.rel (0) target = $region5
  $region4: #{_lambda_.1} parent=0 // pred_region
    _
  $region5: #{_lambda_.1} parent=0 // pred_fallthru
    _
  %v8 = vld [vmem:[%s0] sm:$0xff]
  %v9 = vld [vmem:[%s0 + $0x8] sm:$0xff]
  %10 = vst [vmem:[%s1] sm:$0xff] %v8
  %11 = vst [vmem:[%s1 + $0x8] sm:$0xff] %v9
  // Predicated region
  $region6: #{_lambda_.1} parent=0 // pred_check
    _
  $region7: #{_lambda_.1} parent=0 // pred_check_branch
    %13 = sbr.rel (0) target = $region9
  $region8: #{_lambda_.1} parent=0 // pred_region
    _
  $region9: #{_lambda_.1} parent=0 // pred_fallthru
    _
  // Predicated region
  $region10: #{_lambda_.1} parent=0 // pred_check
    _
  $region11: #{_lambda_.1} parent=0 // pred_check_branch
    %15 = sbr.rel (0) target = $region13
  $region12: #{_lambda_.1} parent=0 // pred_region
    _
  $region13: #{_lambda_.1} parent=0 // pred_fallthru
    _

</llo_original>
